<compile_context>
chip_gen: v5e
topology: v5e:2x2
jax: 0.10.0
libtpu: 0.0.40
codegen_flags: <defaults>
</compile_context>

<pallas_src>
import jax
import jax.numpy as jnp
from jax.experimental import pallas as pl
from jax.experimental.pallas import tpu as pltpu


def _round_up(n, m):
    return (n + m - 1) // m * m


def _choose_batch_tile(batch, block_batch):
    """Pick (tile_rows, padded_batch). Tiles are multiples of 16; for batches
    > 16 we force an even number (>=2) of grid steps so v7x's two TensorCores
    both get work, while overshooting the batch by less than one tile."""
    if batch <= 16:
        tb = _round_up(batch, 8)
        return tb, tb
    steps = max(2, pl.cdiv(batch, block_batch))
    if steps % 2:
        steps += 1
    tb = _round_up(pl.cdiv(batch, steps), 16)
    steps = pl.cdiv(batch, tb)
    return tb, steps * tb


def _dqn_kernel(x_ref, w1_ref, b1_ref, w2_ref, b2_ref, w3_ref, b3_ref, o_ref):
    # x_ref: (TB, IN) f32; w*: bf16 (VMEM-resident); b*: (1, N) f32; o_ref: (TB, OUT_P).
    x = x_ref[...].astype(w1_ref.dtype)                      # cast in-kernel (no wrapper op)
    h1 = jnp.dot(x, w1_ref[...], preferred_element_type=jnp.float32)
    h1 = jnp.maximum(h1 + b1_ref[...], 0.0)

    h2 = jnp.dot(h1.astype(w2_ref.dtype), w2_ref[...],
                 preferred_element_type=jnp.float32)
    h2 = jnp.maximum(h2 + b2_ref[...], 0.0)

    out = jnp.dot(h2.astype(w3_ref.dtype), w3_ref[...],
                  preferred_element_type=jnp.float32)
    o_ref[...] = (out + b3_ref[...]).astype(o_ref.dtype)


def init_dqn_params(key, input_dim, output_dim, hidden=128):
    """PyTorch nn.Linear-style init (U[-1/sqrt(fan_in), 1/sqrt(fan_in)]); weights [in, out]."""
    ks = jax.random.split(key, 6)

    def lin(kw, kb, fan_in, fan_out):
        bound = 1.0 / jnp.sqrt(jnp.float32(fan_in))
        w = jax.random.uniform(kw, (fan_in, fan_out), jnp.float32, -bound, bound)
        b = jax.random.uniform(kb, (1, fan_out), jnp.float32, -bound, bound)
        return w, b

    w1, b1 = lin(ks[0], ks[1], input_dim, hidden)
    w2, b2 = lin(ks[2], ks[3], hidden, hidden)
    w3, b3 = lin(ks[4], ks[5], hidden, output_dim)
    return {"w1": w1, "b1": b1, "w2": w2, "b2": b2, "w3": w3, "b3": b3}


def prepare_dqn_params(params, dtype=jnp.bfloat16):
    """One-time (hoisted out of the per-call path): cast weights to bf16 for the MXU,
    keep biases in f32, zero-pad the output dim to a lane-dense multiple of 128.
    Padded output columns are exactly 0; they are always sliced off in dqn_forward."""
    w1, b1, w2, b2, w3, b3 = (params[k] for k in ("w1", "b1", "w2", "b2", "w3", "b3"))
    in_dim, hidden = w1.shape
    out_dim = w3.shape[1]
    out_p = _round_up(max(out_dim, 128), 128)

    w3p = jnp.zeros((hidden, out_p), dtype).at[:, :out_dim].set(w3.astype(dtype))
    b3p = jnp.zeros((1, out_p), jnp.float32).at[:, :out_dim].set(b3.astype(jnp.float32))
    return {
        "w1": w1.astype(dtype),
        "b1": b1.astype(jnp.float32).reshape(1, hidden),
        "w2": w2.astype(dtype),
        "b2": b2.astype(jnp.float32).reshape(1, hidden),
        "w3": w3p,
        "b3": b3p,
        "out_dim": out_dim,
    }


def dqn_forward(x, kparams, block_batch=1024, out_dtype=jnp.float32):
    """x: [batch, input_dim] f32. kparams: output of prepare_dqn_params().
    Set out_dtype=jnp.bfloat16 on memory-bound v5e if the consumer allows it."""
    w1, b1, w2, b2, w3, b3 = (kparams[k] for k in ("w1", "b1", "w2", "b2", "w3", "b3"))
    out_dim = kparams["out_dim"]
    batch, in_dim = x.shape
    hidden = w1.shape[1]
    out_p = w3.shape[1]

    tb, batch_p = _choose_batch_tile(batch, block_batch)
    if batch_p != batch:
        xp = jnp.zeros((batch_p, in_dim), x.dtype).at[:batch].set(x)
    else:
        xp = x

    grid = (batch_p // tb,)
    resident = lambda a: pl.BlockSpec(a.shape, lambda i: (0,) * a.ndim)

    flops = 2 * batch_p * (in_dim * hidden + hidden * hidden + hidden * out_p)
    bytes_accessed = (
        xp.size * xp.dtype.itemsize
        + sum(a.size * a.dtype.itemsize for a in (w1, b1, w2, b2, w3, b3))
        + batch_p * out_p * jnp.dtype(out_dtype).itemsize
    )

    out_padded = pl.pallas_call(
        _dqn_kernel,
        grid=grid,
        out_shape=jax.ShapeDtypeStruct((batch_p, out_p), out_dtype),
        in_specs=[
            pl.BlockSpec((tb, in_dim), lambda i: (i, 0)),   # x: batch-tiled, real feature width
            resident(w1), resident(b1),
            resident(w2), resident(b2),
            resident(w3), resident(b3),
        ],
        out_specs=pl.BlockSpec((tb, out_p), lambda i: (i, 0)),
        compiler_params=pltpu.CompilerParams(
            dimension_semantics=("parallel",),
        ),
        cost_estimate=pl.CostEstimate(
            flops=flops, transcendentals=0, bytes_accessed=bytes_accessed),
    )(xp, w1, b1, w2, b2, w3, b3)

    if batch_p != batch or out_p != out_dim:
        return out_padded[:batch, :out_dim]
    return out_padded


if __name__ == "__main__":
    key = jax.random.PRNGKey(0)
    k_x, k_p = jax.random.split(key)

    batch, input_dim, output_dim = 8, 4, 2  # CartPole-like state/action dims
    x = jax.random.normal(k_x, (batch, input_dim), jnp.float32)

    params = init_dqn_params(k_p, input_dim, output_dim)
    kparams = prepare_dqn_params(params)    # one-time pad/cast, hoisted out of forward

    out = dqn_forward(x, kparams)
    jax.block_until_ready(out)
    assert out.shape == (batch, output_dim)

    # Reference 1: matched precision (bf16 weights/activations, f32 accumulation) -> tight tol.
    bf16, f32 = jnp.bfloat16, jnp.float32
    h = jnp.dot(x.astype(bf16), params["w1"].astype(bf16), preferred_element_type=f32)
    h = jnp.maximum(h + params["b1"], 0.0)
    h = jnp.dot(h.astype(bf16), params["w2"].astype(bf16), preferred_element_type=f32)
    h = jnp.maximum(h + params["b2"], 0.0)
    ref_bf16 = jnp.dot(h.astype(bf16), params["w3"].astype(bf16),
                       preferred_element_type=f32) + params["b3"]
    assert jnp.allclose(out, ref_bf16, atol=1e-4, rtol=1e-4), "mismatch vs bf16 reference"

    # Reference 2: original full-f32 module semantics -> loose tol (bf16 weight quantization).
    ref = x
    ref = jnp.maximum(ref @ params["w1"] + params["b1"], 0.0)
    ref = jnp.maximum(ref @ params["w2"] + params["b2"], 0.0)
    ref = ref @ params["w3"] + params["b3"]
    assert jnp.allclose(out, ref, atol=5e-2, rtol=5e-2), "mismatch vs f32 reference"

    print("KERNEL_OK")
</pallas_src>

<mosaic_0001>
module attributes {stable_mosaic.version = 11 : i64} {
  func.func @_dqn_kernel(%arg0: i32, %arg1: memref<8x4xf32, #tpu.memory_space<vmem>>, %arg2: memref<4x128xbf16, #tpu.memory_space<vmem>>, %arg3: memref<1x128xf32, #tpu.memory_space<vmem>>, %arg4: memref<128x128xbf16, #tpu.memory_space<vmem>>, %arg5: memref<1x128xf32, #tpu.memory_space<vmem>>, %arg6: memref<128x128xbf16, #tpu.memory_space<vmem>>, %arg7: memref<1x128xf32, #tpu.memory_space<vmem>>, %arg8: memref<8x128xf32, #tpu.memory_space<vmem>>) attributes {dimension_semantics = [#tpu.dimension_semantics<parallel>], iteration_bounds = array<i64: 1>, scalar_prefetch = 0 : i64, scratch_operands = 0 : i64, tpu.core_type = #tpu.core_type<tc>, window_params = [{transform_indices = @transform_0, window_bounds = array<i64: 8, 4>}, {pipeline_mode = #tpu.pipeline_mode<synchronous>, transform_indices = @transform_1, window_bounds = array<i64: 4, 128>}, {pipeline_mode = #tpu.pipeline_mode<synchronous>, transform_indices = @transform_2, window_bounds = array<i64: 1, 128>}, {pipeline_mode = #tpu.pipeline_mode<synchronous>, transform_indices = @transform_3, window_bounds = array<i64: 128, 128>}, {pipeline_mode = #tpu.pipeline_mode<synchronous>, transform_indices = @transform_4, window_bounds = array<i64: 1, 128>}, {pipeline_mode = #tpu.pipeline_mode<synchronous>, transform_indices = @transform_5, window_bounds = array<i64: 128, 128>}, {pipeline_mode = #tpu.pipeline_mode<synchronous>, transform_indices = @transform_6, window_bounds = array<i64: 1, 128>}, {transform_indices = @transform_7, window_bounds = array<i64: 8, 128>}]} {
    %c0 = arith.constant 0 : index
    %c0_0 = arith.constant 0 : index
    %0 = vector.load %arg1[%c0, %c0_0] : memref<8x4xf32, #tpu.memory_space<vmem>>, vector<8x4xf32>
    %1 = arith.truncf %0 : vector<8x4xf32> to vector<8x4xbf16>
    %c0_1 = arith.constant 0 : index
    %c0_2 = arith.constant 0 : index
    %2 = vector.load %arg2[%c0_1, %c0_2] : memref<4x128xbf16, #tpu.memory_space<vmem>>, vector<4x128xbf16>
    %cst = arith.constant dense<0.000000e+00> : vector<8x128xf32>
    %3 = tpu.matmul %1, %2, %cst {dimension_numbers = #tpu.dot_dimension_numbers<[1], [0], [0], [1], [0, 0, 1, 1], [], []>} : vector<8x4xbf16>, vector<4x128xbf16>, vector<8x128xf32> -> vector<8x128xf32>
    %c0_3 = arith.constant 0 : index
    %c0_4 = arith.constant 0 : index
    %4 = vector.load %arg3[%c0_3, %c0_4] : memref<1x128xf32, #tpu.memory_space<vmem>>, vector<1x128xf32>
    %5 = vector.broadcast %4 : vector<1x128xf32> to vector<8x128xf32>
    %6 = arith.addf %3, %5 : vector<8x128xf32>
    %cst_5 = arith.constant 0.000000e+00 : f32
    %7 = vector.broadcast %cst_5 : f32 to vector<8x128xf32>
    %8 = arith.maximumf %6, %7 : vector<8x128xf32>
    %9 = arith.truncf %8 : vector<8x128xf32> to vector<8x128xbf16>
    %c0_6 = arith.constant 0 : index
    %c0_7 = arith.constant 0 : index
    %10 = vector.load %arg4[%c0_6, %c0_7] : memref<128x128xbf16, #tpu.memory_space<vmem>>, vector<128x128xbf16>
    %cst_8 = arith.constant dense<0.000000e+00> : vector<8x128xf32>
    %11 = tpu.matmul %9, %10, %cst_8 {dimension_numbers = #tpu.dot_dimension_numbers<[1], [0], [0], [1], [0, 0, 1, 1], [], []>} : vector<8x128xbf16>, vector<128x128xbf16>, vector<8x128xf32> -> vector<8x128xf32>
    %c0_9 = arith.constant 0 : index
    %c0_10 = arith.constant 0 : index
    %12 = vector.load %arg5[%c0_9, %c0_10] : memref<1x128xf32, #tpu.memory_space<vmem>>, vector<1x128xf32>
    %13 = vector.broadcast %12 : vector<1x128xf32> to vector<8x128xf32>
    %14 = arith.addf %11, %13 : vector<8x128xf32>
    %cst_11 = arith.constant 0.000000e+00 : f32
    %15 = vector.broadcast %cst_11 : f32 to vector<8x128xf32>
    %16 = arith.maximumf %14, %15 : vector<8x128xf32>
    %17 = arith.truncf %16 : vector<8x128xf32> to vector<8x128xbf16>
    %c0_12 = arith.constant 0 : index
    %c0_13 = arith.constant 0 : index
    %18 = vector.load %arg6[%c0_12, %c0_13] : memref<128x128xbf16, #tpu.memory_space<vmem>>, vector<128x128xbf16>
    %cst_14 = arith.constant dense<0.000000e+00> : vector<8x128xf32>
    %19 = tpu.matmul %17, %18, %cst_14 {dimension_numbers = #tpu.dot_dimension_numbers<[1], [0], [0], [1], [0, 0, 1, 1], [], []>} : vector<8x128xbf16>, vector<128x128xbf16>, vector<8x128xf32> -> vector<8x128xf32>
    %c0_15 = arith.constant 0 : index
    %c0_16 = arith.constant 0 : index
    %20 = vector.load %arg7[%c0_15, %c0_16] : memref<1x128xf32, #tpu.memory_space<vmem>>, vector<1x128xf32>
    %21 = vector.broadcast %20 : vector<1x128xf32> to vector<8x128xf32>
    %22 = arith.addf %19, %21 : vector<8x128xf32>
    %c0_17 = arith.constant 0 : index
    %c0_18 = arith.constant 0 : index
    %23 = vector.load %arg8[%c0_17, %c0_18] : memref<8x128xf32, #tpu.memory_space<vmem>>, vector<8x128xf32>
    tpu.vector_store %arg8[%c0_17, %c0_18], %22 {strides = array<i32>} : memref<8x128xf32, #tpu.memory_space<vmem>>, vector<8x128xf32>,
    return
  }
  func.func @transform_0(%arg0: i32) -> (i32, i32) {
    %c0_i32 = arith.constant 0 : i32
    %c0_i32_0 = arith.constant 0 : i32
    return %arg0, %c0_i32 : i32, i32
  }
  func.func @transform_1(%arg0: i32) -> (i32, i32) {
    %c0_i32 = arith.constant 0 : i32
    %c0_i32_0 = arith.constant 0 : i32
    %c0_i32_1 = arith.constant 0 : i32
    return %c0_i32, %c0_i32_0 : i32, i32
  }
  func.func @transform_2(%arg0: i32) -> (i32, i32) {
    %c0_i32 = arith.constant 0 : i32
    %c0_i32_0 = arith.constant 0 : i32
    %c0_i32_1 = arith.constant 0 : i32
    return %c0_i32, %c0_i32_0 : i32, i32
  }
  func.func @transform_3(%arg0: i32) -> (i32, i32) {
    %c0_i32 = arith.constant 0 : i32
    %c0_i32_0 = arith.constant 0 : i32
    %c0_i32_1 = arith.constant 0 : i32
    return %c0_i32, %c0_i32_0 : i32, i32
  }
  func.func @transform_4(%arg0: i32) -> (i32, i32) {
    %c0_i32 = arith.constant 0 : i32
    %c0_i32_0 = arith.constant 0 : i32
    %c0_i32_1 = arith.constant 0 : i32
    return %c0_i32, %c0_i32_0 : i32, i32
  }
  func.func @transform_5(%arg0: i32) -> (i32, i32) {
    %c0_i32 = arith.constant 0 : i32
    %c0_i32_0 = arith.constant 0 : i32
    %c0_i32_1 = arith.constant 0 : i32
    return %c0_i32, %c0_i32_0 : i32, i32
  }
  func.func @transform_6(%arg0: i32) -> (i32, i32) {
    %c0_i32 = arith.constant 0 : i32
    %c0_i32_0 = arith.constant 0 : i32
    %c0_i32_1 = arith.constant 0 : i32
    return %c0_i32, %c0_i32_0 : i32, i32
  }
  func.func @transform_7(%arg0: i32) -> (i32, i32) {
    %c0_i32 = arith.constant 0 : i32
    %c0_i32_0 = arith.constant 0 : i32
    return %arg0, %c0_i32 : i32, i32
  }
}

</mosaic_0001>

<llo_original>
// kernel: tpu_custom_call.1
$region0: #{tpu_custom_call.1}
  #allocation0 [shape = 'u32[]', space=smem, size = 0x4, offset = 0x4, fixed_abs, tag = 'smem constant byte address 0x4 - core index']
  #allocation1 [shape = 'u32[72,128]{1,0:T(1,128)}', space=vmem, size = 0x9000, scoped, tag = 'internal scratch']
  %s0 = inlined_call_operand.vmem [shape: f32[8,4], index: 0, kind: input, shape index: {}]
  %s1 = inlined_call_operand.vmem [shape: bf16[4,128], index: 1, kind: input, shape index: {}]
  %s2 = inlined_call_operand.vmem [shape: f32[1,128], index: 2, kind: input, shape index: {}]
  %s3 = inlined_call_operand.hbm [shape: bf16[128,128], index: 3, kind: input, shape index: {}]
  %s4 = inlined_call_operand.vmem [shape: f32[1,128], index: 4, kind: input, shape index: {}]
  %s5 = inlined_call_operand.hbm [shape: bf16[128,128], index: 5, kind: input, shape index: {}]
  %s6 = inlined_call_operand.vmem [shape: f32[1,128], index: 6, kind: input, shape index: {}]
  %s7 = inlined_call_operand.hbm [shape: f32[8,128], index: 7, kind: output, shape index: {}]
  %s8 = sld [smem:[#allocation0]]
  $region46: #{tpu_custom_call.1} parent=0
    _
  %s10 = ssub.s32 1, %s8
  %s11 = scalar_select 0, %s10, %s8
  $region1: #{tpu_custom_call.1} parent=0
    #allocation2 [shape = 'u8[32768]{0}', space=vmem, size = 0x8000, scoped, tag = 'input window, operand 3, single buffered']
    #allocation3 [shape = 's32[1]{0}', space=sflag, size = 0x4, scoped, tag = 'scoped memory for tpu_custom_call.1']
    #allocation4 [shape = 's32[1]{0}', space=sflag, size = 0x4, scoped, tag = 'scoped memory for tpu_custom_call.1']
    #allocation5 [shape = 'u8[32768]{0}', space=vmem, size = 0x8000, scoped, tag = 'input window, operand 5, single buffered']
    #allocation6 [shape = 's32[1]{0}', space=sflag, size = 0x4, scoped, tag = 'scoped memory for tpu_custom_call.1']
    #allocation7 [shape = 'u8[4096]{0}', space=vmem, size = 0x1000, scoped, tag = 'output window, operand 0, single buffered']
    %12 = vsyncpa [#allocation3], 0
    %13 = vsyncpa [#allocation6], 0
    %14 = vsyncpa [#allocation4], 0
    // Predicated region
    $region2: #{tpu_custom_call.1} parent=1 // pred_check
      _
    $region3: #{tpu_custom_call.1} parent=1 // pred_check_branch
      %16 = sbr.rel (0) target = $region5
    $region4: #{tpu_custom_call.1} parent=1 // pred_region
      _
    $region5: #{tpu_custom_call.1} parent=1 // pred_fallthru
      _
    // Predicated region
    $region6: #{tpu_custom_call.1} parent=1 // pred_check
      _
    $region7: #{tpu_custom_call.1} parent=1 // pred_check_branch
      %18 = sbr.rel (0) target = $region9
    $region8: #{tpu_custom_call.1} parent=1 // pred_region
      _
    $region9: #{tpu_custom_call.1} parent=1 // pred_fallthru
      _
    // Predicated region
    $region10: #{tpu_custom_call.1} parent=1 // pred_check
      _
    $region11: #{tpu_custom_call.1} parent=1 // pred_check_branch
      %20 = sbr.rel (0) target = $region13
    $region12: #{tpu_custom_call.1} parent=1 // pred_region
      _
    $region13: #{tpu_custom_call.1} parent=1 // pred_fallthru
      _
    // Predicated region
    $region14: #{tpu_custom_call.1} parent=1 // pred_check
      _
    $region15: #{tpu_custom_call.1} parent=1 // pred_check_branch
      %22 = sbr.rel (0) target = $region17
    $region16: #{tpu_custom_call.1} parent=1 // pred_region
      %24 = vsyncadd [#allocation3], 0
      %s25 = sshll.u32 %s3, 4
      %s26 = int_to_ptr.hbm [resolvable:$true] %s25
      %s27 = sshll.u32 [#allocation2], 4
      %s28 = int_to_ptr.vmem [resolvable:$true] %s27
      %33 = dma.hbm_to_vmem [thread:$0]  %s26, 1024, %s28, [#allocation3], 64, 64, 4
    $region17: #{tpu_custom_call.1} parent=1 // pred_fallthru
      _
    // Predicated region
    $region18: #{tpu_custom_call.1} parent=1 // pred_check
      _
    $region19: #{tpu_custom_call.1} parent=1 // pred_check_branch
      %35 = sbr.rel (0) target = $region21
    $region20: #{tpu_custom_call.1} parent=1 // pred_region
      _
    $region21: #{tpu_custom_call.1} parent=1 // pred_fallthru
      _
    // Predicated region
    $region22: #{tpu_custom_call.1} parent=1 // pred_check
      _
    $region23: #{tpu_custom_call.1} parent=1 // pred_check_branch
      %37 = sbr.rel (0) target = $region25
    $region24: #{tpu_custom_call.1} parent=1 // pred_region
      %39 = vsyncadd [#allocation6], 0
      %s40 = sshll.u32 %s5, 4
      %s41 = int_to_ptr.hbm [resolvable:$true] %s40
      %s42 = sshll.u32 [#allocation5], 4
      %s43 = int_to_ptr.vmem [resolvable:$true] %s42
      %48 = dma.hbm_to_vmem [thread:$0]  %s41, 1024, %s43, [#allocation6], 64, 64, 4
    $region25: #{tpu_custom_call.1} parent=1 // pred_fallthru
      _
    // Predicated region
    $region26: #{tpu_custom_call.1} parent=1 // pred_check
      _
    $region27: #{tpu_custom_call.1} parent=1 // pred_check_branch
      %50 = sbr.rel (0) target = $region29
    $region28: #{tpu_custom_call.1} parent=1 // pred_region
      _
    $region29: #{tpu_custom_call.1} parent=1 // pred_fallthru
      _
    // Predicated region
    $region30: #{tpu_custom_call.1} parent=1 // pred_check
      _
    $region31: #{tpu_custom_call.1} parent=1 // pred_check_branch
      %52 = sbr.rel (0) target = $region33
    $region32: #{tpu_custom_call.1} parent=1 // pred_region
      %54 = dma.done [#allocation3], 1024
    $region33: #{tpu_custom_call.1} parent=1 // pred_fallthru
      _
    // Predicated region
    $region34: #{tpu_custom_call.1} parent=1 // pred_check
      _
    $region35: #{tpu_custom_call.1} parent=1 // pred_check_branch
      %56 = sbr.rel (0) target = $region37
    $region36: #{tpu_custom_call.1} parent=1 // pred_region
      %58 = dma.done [#allocation6], 1024
    $region37: #{tpu_custom_call.1} parent=1 // pred_fallthru
      _
    %v60 = vld [vmem:[%s0] sm:$0xff]
    %v61 = vpack.c.bf16 %v60, %v60
    %v62 = vld [vmem:[%s1] sm:$0x3]
    %v63 = vld [vmem:[%s2] sm:$0x1]
    %v65 = vperm.slane %v63, 0
    %vm67 = vcmask 31744
    %v69 = vsel %vm67, %v61, 0
    %vm71 = vcmask 1041408
    %v73 = vsel %vm71, %v62, 0
    %75 = vmatpush.bf16.msra.mxu0 0
    %76 = vmatpush.bf16.msra.mxu0 0
    %77 = vmatpush.bf16.msra.mxu0 0
    %78 = vmatpush.bf16.msra.mxu0 0
    %79 = vmatpush.bf16.msra.mxu0 0
    %80 = vmatpush.bf16.msra.mxu0 0
    %81 = vmatpush.bf16.msra.mxu0 0
    %82 = vmatpush.bf16.msra.mxu0 %v73
    %83 = vmatmul.bf16.gmra.mxu0 %v69
    %v84 = vpop.f32.mrf.mxu0
    %v85 = vadd.f32 %v65, %v84
    %v86 = vpop.f32.mrf.mxu0
    %87 = vdwg.mxu0
    %v88 = vmax.f32 %v85, 0.0
    %v89 = vpack.c.bf16 %v88, %v88
    %v90 = vld [vmem:[#allocation2] sm:$0xf]
    %v91 = vld [vmem:[#allocation2 + $0x4] sm:$0xf]
    %v92 = vld [vmem:[#allocation2 + $0x8] sm:$0xf]
    %v93 = vld [vmem:[#allocation2 + $0xc] sm:$0xf]
    %v94 = vld [vmem:[#allocation2 + $0x10] sm:$0xf]
    %v95 = vld [vmem:[#allocation2 + $0x14] sm:$0xf]
    %v96 = vld [vmem:[#allocation2 + $0x18] sm:$0xf]
    %v97 = vld [vmem:[#allocation2 + $0x1c] sm:$0xf]
    %v98 = vld [vmem:[#allocation2 + $0x20] sm:$0xf]
    %v99 = vld [vmem:[#allocation2 + $0x24] sm:$0xf]
    %v100 = vld [vmem:[#allocation2 + $0x28] sm:$0xf]
    %v101 = vld [vmem:[#allocation2 + $0x2c] sm:$0xf]
    %v102 = vld [vmem:[#allocation2 + $0x30] sm:$0xf]
    %v103 = vld [vmem:[#allocation2 + $0x34] sm:$0xf]
    %v104 = vld [vmem:[#allocation2 + $0x38] sm:$0xf]
    %v105 = vld [vmem:[#allocation2 + $0x3c] sm:$0xf]
    %v106 = vld [vmem:[%s4] sm:$0x1]
    %v108 = vperm.slane %v106, 0
    %v126 = vunpack.c.l.b16 %v90
    %v127 = vunpack.c.l.b16 %v91
    %v128 = vunpack.c.l.b16 %v92
    %v129 = vunpack.c.l.b16 %v93
    %v130 = vunpack.c.l.b16 %v94
    %v131 = vunpack.c.l.b16 %v95
    %v132 = vunpack.c.l.b16 %v96
    %v133 = vunpack.c.l.b16 %v97
    %v134 = vunpack.c.l.b16 %v98
    %v135 = vunpack.c.l.b16 %v99
    %v136 = vunpack.c.l.b16 %v100
    %v137 = vunpack.c.l.b16 %v101
    %v138 = vunpack.c.l.b16 %v102
    %v139 = vunpack.c.l.b16 %v103
    %v140 = vunpack.c.l.b16 %v104
    %v141 = vunpack.c.l.b16 %v105
    %v142 = vpack.c.b16 %v127, %v126
    %v143 = vpack.c.b16 %v129, %v128
    %v144 = vpack.c.b16 %v131, %v130
    %v145 = vpack.c.b16 %v133, %v132
    %v146 = vpack.c.b16 %v135, %v134
    %v147 = vpack.c.b16 %v137, %v136
    %v148 = vpack.c.b16 %v139, %v138
    %v149 = vpack.c.b16 %v141, %v140
    %158 = vmatpush.bf16.msra.mxu0 %v149
    %159 = vmatpush.bf16.msra.mxu0 %v148
    %160 = vmatpush.bf16.msra.mxu0 %v147
    %161 = vmatpush.bf16.msra.mxu0 %v146
    %162 = vmatpush.bf16.msra.mxu0 %v145
    %163 = vmatpush.bf16.msra.mxu0 %v144
    %164 = vmatpush.bf16.msra.mxu0 %v143
    %165 = vmatpush.bf16.msra.mxu0 %v142
    %166 = vmatmul.bf16.gmra.mxu0 %v89
    %v167 = vpop.f32.mrf.mxu0
    %v168 = vadd.f32 %v108, %v167
    %v169 = vpop.f32.mrf.mxu0
    %170 = vdwg.mxu0
    %v171 = vmax.f32 %v168, 0.0
    %v172 = vpack.c.bf16 %v171, %v171
    %v173 = vld [vmem:[#allocation5] sm:$0xf]
    %v174 = vld [vmem:[#allocation5 + $0x4] sm:$0xf]
    %v175 = vld [vmem:[#allocation5 + $0x8] sm:$0xf]
    %v176 = vld [vmem:[#allocation5 + $0xc] sm:$0xf]
    %v177 = vld [vmem:[#allocation5 + $0x10] sm:$0xf]
    %v178 = vld [vmem:[#allocation5 + $0x14] sm:$0xf]
    %v179 = vld [vmem:[#allocation5 + $0x18] sm:$0xf]
    %v180 = vld [vmem:[#allocation5 + $0x1c] sm:$0xf]
    %v181 = vld [vmem:[#allocation5 + $0x20] sm:$0xf]
    %v182 = vld [vmem:[#allocation5 + $0x24] sm:$0xf]
    %v183 = vld [vmem:[#allocation5 + $0x28] sm:$0xf]
    %v184 = vld [vmem:[#allocation5 + $0x2c] sm:$0xf]
    %v185 = vld [vmem:[#allocation5 + $0x30] sm:$0xf]
    %v186 = vld [vmem:[#allocation5 + $0x34] sm:$0xf]
    %v187 = vld [vmem:[#allocation5 + $0x38] sm:$0xf]
    %v188 = vld [vmem:[#allocation5 + $0x3c] sm:$0xf]
    %v189 = vld [vmem:[%s6] sm:$0x1]
    %v191 = vperm.slane %v189, 0
    %v209 = vunpack.c.l.b16 %v173
    %v210 = vunpack.c.l.b16 %v174
    %v211 = vunpack.c.l.b16 %v175
    %v212 = vunpack.c.l.b16 %v176
    %v213 = vunpack.c.l.b16 %v177
    %v214 = vunpack.c.l.b16 %v178
    %v215 = vunpack.c.l.b16 %v179
    %v216 = vunpack.c.l.b16 %v180
    %v217 = vunpack.c.l.b16 %v181
    %v218 = vunpack.c.l.b16 %v182
    %v219 = vunpack.c.l.b16 %v183
    %v220 = vunpack.c.l.b16 %v184
    %v221 = vunpack.c.l.b16 %v185
    %v222 = vunpack.c.l.b16 %v186
    %v223 = vunpack.c.l.b16 %v187
    %v224 = vunpack.c.l.b16 %v188
    %v225 = vpack.c.b16 %v210, %v209
    %v226 = vpack.c.b16 %v212, %v211
    %v227 = vpack.c.b16 %v214, %v213
    %v228 = vpack.c.b16 %v216, %v215
    %v229 = vpack.c.b16 %v218, %v217
    %v230 = vpack.c.b16 %v220, %v219
    %v231 = vpack.c.b16 %v222, %v221
    %v232 = vpack.c.b16 %v224, %v223
    %241 = vmatpush.bf16.msra.mxu0 %v232
    %242 = vmatpush.bf16.msra.mxu0 %v231
    %243 = vmatpush.bf16.msra.mxu0 %v230
    %244 = vmatpush.bf16.msra.mxu0 %v229
    %245 = vmatpush.bf16.msra.mxu0 %v228
    %246 = vmatpush.bf16.msra.mxu0 %v227
    %247 = vmatpush.bf16.msra.mxu0 %v226
    %248 = vmatpush.bf16.msra.mxu0 %v225
    %249 = vmatmul.bf16.gmra.mxu0 %v172
    %v250 = vpop.f32.mrf.mxu0
    %v251 = vadd.f32 %v191, %v250
    %v252 = vpop.f32.mrf.mxu0
    %253 = vdwg.mxu0
    %254 = vst [vmem:[#allocation7] sm:$0xff] %v251
    // Predicated region
    $region38: #{tpu_custom_call.1} parent=1 // pred_check
      _
    $region39: #{tpu_custom_call.1} parent=1 // pred_check_branch
      %256 = sbr.rel (0) target = $region41
    $region40: #{tpu_custom_call.1} parent=1 // pred_region
      %258 = vsyncadd [#allocation4], 0
      %s260 = sshll.u32 [#allocation7], 4
      %s261 = int_to_ptr.vmem [resolvable:$true] %s260
      %s262 = sshll.u32 %s7, 4
      %s263 = int_to_ptr.hbm [resolvable:$true] %s262
      %265 = dma.vmem_to_hbm [thread:$0]  %s261, 128, %s263, [#allocation4]
    $region41: #{tpu_custom_call.1} parent=1 // pred_fallthru
      _
    // Predicated region
    $region42: #{tpu_custom_call.1} parent=1 // pred_check
      _
    $region43: #{tpu_custom_call.1} parent=1 // pred_check_branch
      %267 = sbr.rel (0) target = $region45
    $region44: #{tpu_custom_call.1} parent=1 // pred_region
      %269 = dma.done [#allocation4], 128
    $region45: #{tpu_custom_call.1} parent=1 // pred_fallthru
      _
    %270 = vsyncpa [#allocation3], 1
    %271 = vsyncpa [#allocation6], 1
    %272 = vsyncpa [#allocation4], 1

</llo_original>
